<compile_context>
chip_gen: v7x
topology: tpu7x:2x2x1
jax: 0.10.0
libtpu: 0.0.40
codegen_flags: <defaults>
</compile_context>

<pallas_src>
import functools

import jax
import jax.numpy as jnp
from jax import lax
from jax.experimental import pallas as pl
from jax.experimental.pallas import tpu as pltpu

BN_EPS = 1e-5


def _linear_block_kernel(x_ref, w1_ref, b1_ref, g1_ref, be1_ref,
                         w2_ref, b2_ref, g2_ref, be2_ref, o_ref,
                         *, B, C, L):
    # x_ref / o_ref: (B*C, L) f32.   w*_ref: (L, L) bf16, already (in, out).
    # b*_ref: (1, L) f32.            g* / be*_ref: (1, C, 1) f32.
    M = B * C
    x = x_ref[...].astype(jnp.float32)                       # (M, L)

    def sub_block(inp, w_ref, b_ref, g_ref, be_ref):
        # One explicit 2D matmul on the MXU: bf16 operands, f32 accumulation.
        y = jnp.dot(inp.astype(jnp.bfloat16), w_ref[...],
                    preferred_element_type=jnp.float32)      # (M, L) f32
        y = y + b_ref[...]
        # BatchNorm1d (training-mode batch stats), single pass over y:
        # compute `centered` once and reuse it for variance + normalization.
        y3 = y.reshape(B, C, L)
        mean = jnp.mean(y3, axis=(0, 2), keepdims=True)      # (1, C, 1)
        centered = y3 - mean
        var = jnp.mean(centered * centered, axis=(0, 2), keepdims=True)
        y3 = centered * lax.rsqrt(var + BN_EPS) * g_ref[...] + be_ref[...]
        # ReLU (dropout == identity, see TODO above).
        return jnp.maximum(y3, 0.0).reshape(M, L)

    y = sub_block(x, w1_ref, b1_ref, g1_ref, be1_ref)
    y = sub_block(y, w2_ref, b2_ref, g2_ref, be2_ref)
    o_ref[...] = (x + y).astype(o_ref.dtype)                 # residual add


def prepare_params(params):
    """One-time glue (hoisted out of the per-forward path): transpose the
    nn.Linear weights to (in, out) and pre-cast them to bf16 for the MXU."""
    return {
        "w1t": params["w1"].T.astype(jnp.bfloat16),
        "w2t": params["w2"].T.astype(jnp.bfloat16),
        "b1": params["b1"].astype(jnp.float32),
        "b2": params["b2"].astype(jnp.float32),
        "g1": params["g1"].astype(jnp.float32),
        "be1": params["be1"].astype(jnp.float32),
        "g2": params["g2"].astype(jnp.float32),
        "be2": params["be2"].astype(jnp.float32),
    }


def linear_block_forward(x, prep):
    """x: (B, C, L) float32. prep: output of prepare_params()."""
    B, C, L = x.shape
    M = B * C
    # Present the activation as a flat (M, L) slab (free XLA reshape); M is
    # explicit for the single matmul and for future grid tiling.
    x2 = x.reshape(M, L)
    b1 = prep["b1"].reshape(1, L)
    b2 = prep["b2"].reshape(1, L)
    g1 = prep["g1"].reshape(1, C, 1)
    g2 = prep["g2"].reshape(1, C, 1)
    be1 = prep["be1"].reshape(1, C, 1)
    be2 = prep["be2"].reshape(1, C, 1)

    vmem = pl.BlockSpec(memory_space=pltpu.MemorySpace.VMEM)
    kernel = functools.partial(_linear_block_kernel, B=B, C=C, L=L)
    out2 = pl.pallas_call(
        kernel,
        out_shape=jax.ShapeDtypeStruct((M, L), x.dtype),
        in_specs=[vmem] * 9,
        out_specs=vmem,
    )(x2, prep["w1t"], b1, g1, be1, prep["w2t"], b2, g2, be2)
    return out2.reshape(B, C, L)


def _reference_forward(x, params, *, bf16_matmul):
    """Pure-JAX reference. bf16_matmul=True mirrors the kernel's MXU path,
    bf16_matmul=False is the full-f32 (PyTorch-faithful) forward."""
    def sub(inp, w, b, g, be):
        if bf16_matmul:
            y = jnp.einsum("bcl,lm->bcm", inp.astype(jnp.bfloat16),
                           w.T.astype(jnp.bfloat16),
                           preferred_element_type=jnp.float32)
        else:
            y = jnp.einsum("bcl,ml->bcm", inp, w)
        y = y + b.reshape(1, 1, -1)
        mean = jnp.mean(y, axis=(0, 2), keepdims=True)
        centered = y - mean
        var = jnp.mean(centered * centered, axis=(0, 2), keepdims=True)
        y = centered * lax.rsqrt(var + BN_EPS) * g.reshape(1, -1, 1) \
            + be.reshape(1, -1, 1)
        return jnp.maximum(y, 0.0)

    y = sub(x, params["w1"], params["b1"], params["g1"], params["be1"])
    y = sub(y, params["w2"], params["b2"], params["g2"], params["be2"])
    return x + y


def init_params(key, linear_size, channel_size):
    L, C = linear_size, channel_size
    ks = jax.random.split(key, 4)
    bound = 1.0 / jnp.sqrt(L)
    return {
        # nn.Linear-style uniform init (PyTorch (out, in) layout), deterministic.
        "w1": jax.random.uniform(ks[0], (L, L), jnp.float32, -bound, bound),
        "b1": jax.random.uniform(ks[1], (L,), jnp.float32, -bound, bound),
        "w2": jax.random.uniform(ks[2], (L, L), jnp.float32, -bound, bound),
        "b2": jax.random.uniform(ks[3], (L,), jnp.float32, -bound, bound),
        # BatchNorm affine params: gamma=1, beta=0 (PyTorch default).
        "g1": jnp.ones((C,), jnp.float32),
        "be1": jnp.zeros((C,), jnp.float32),
        "g2": jnp.ones((C,), jnp.float32),
        "be2": jnp.zeros((C,), jnp.float32),
    }


if __name__ == "__main__":
    B, C, L = 2, 4, 32   # batch, channel_size, linear_size
    key = jax.random.PRNGKey(0)
    k_x, k_p = jax.random.split(key)
    x = jax.random.normal(k_x, (B, C, L), jnp.float32)
    params = init_params(k_p, L, C)
    prep = prepare_params(params)   # hoisted transpose + bf16 cast (once)

    out = linear_block_forward(x, prep)
    out = jax.block_until_ready(out)
    assert out.shape == (B, C, L)

    # Tight correctness check vs a JAX reference that uses the same
    # bf16-in / f32-accumulate matmul as the kernel.
    ref_bf16 = _reference_forward(x, params, bf16_matmul=True)
    assert jnp.allclose(out, ref_bf16, atol=2e-3, rtol=2e-3), \
        "mismatch vs bf16-matmul JAX reference"

    # Loose check vs the full-f32 (PyTorch-faithful) reference: bf16 MXU
    # operands cost a few 1e-3..1e-2 of absolute precision (expected).
    ref_f32 = _reference_forward(x, params, bf16_matmul=False)
    assert jnp.allclose(out, ref_f32, atol=5e-2, rtol=5e-2), \
        "mismatch vs f32 JAX reference"

    print("KERNEL_OK")
</pallas_src>

<mosaic_0001>
module attributes {stable_mosaic.version = 11 : i64} {
  func.func @_linear_block_kernel(%arg0: memref<8x32xf32, #tpu.memory_space<vmem>>, %arg1: memref<32x32xbf16, #tpu.memory_space<vmem>>, %arg2: memref<1x32xf32, #tpu.memory_space<vmem>>, %arg3: memref<1x4x1xf32, #tpu.memory_space<vmem>>, %arg4: memref<1x4x1xf32, #tpu.memory_space<vmem>>, %arg5: memref<32x32xbf16, #tpu.memory_space<vmem>>, %arg6: memref<1x32xf32, #tpu.memory_space<vmem>>, %arg7: memref<1x4x1xf32, #tpu.memory_space<vmem>>, %arg8: memref<1x4x1xf32, #tpu.memory_space<vmem>>, %arg9: memref<8x32xf32, #tpu.memory_space<vmem>>) attributes {dimension_semantics = [], scalar_prefetch = 0 : i64, scratch_operands = 0 : i64, tpu.core_type = #tpu.core_type<tc>} {
    %c0 = arith.constant 0 : index
    %c0_0 = arith.constant 0 : index
    %0 = vector.load %arg0[%c0, %c0_0] : memref<8x32xf32, #tpu.memory_space<vmem>>, vector<8x32xf32>
    %1 = arith.truncf %0 : vector<8x32xf32> to vector<8x32xbf16>
    %c0_1 = arith.constant 0 : index
    %c0_2 = arith.constant 0 : index
    %2 = vector.load %arg1[%c0_1, %c0_2] : memref<32x32xbf16, #tpu.memory_space<vmem>>, vector<32x32xbf16>
    %cst = arith.constant dense<0.000000e+00> : vector<8x32xf32>
    %3 = tpu.matmul %1, %2, %cst {dimension_numbers = #tpu.dot_dimension_numbers<[1], [0], [0], [1], [0, 0, 1, 1], [], []>} : vector<8x32xbf16>, vector<32x32xbf16>, vector<8x32xf32> -> vector<8x32xf32>
    %c0_3 = arith.constant 0 : index
    %c0_4 = arith.constant 0 : index
    %4 = vector.load %arg2[%c0_3, %c0_4] : memref<1x32xf32, #tpu.memory_space<vmem>>, vector<1x32xf32>
    %5 = vector.broadcast %4 : vector<1x32xf32> to vector<8x32xf32>
    %6 = arith.addf %3, %5 : vector<8x32xf32>
    %7 = vector.shape_cast %6 : vector<8x32xf32> to vector<2x4x32xf32>
    %cst_5 = arith.constant dense<0.000000e+00> : vector<4xf32>
    %8 = vector.multi_reduction <add>, %7, %cst_5 [0, 2] : vector<2x4x32xf32> to vector<4xf32>
    %9 = vector.shape_cast %8 : vector<4xf32> to vector<1x4x1xf32>
    %cst_6 = arith.constant 6.400000e+01 : f32
    %10 = vector.broadcast %cst_6 : f32 to vector<1x4x1xf32>
    %11 = arith.divf %9, %10 : vector<1x4x1xf32>
    %12 = vector.broadcast %11 : vector<1x4x1xf32> to vector<2x4x32xf32>
    %13 = arith.subf %7, %12 : vector<2x4x32xf32>
    %14 = arith.mulf %13, %13 : vector<2x4x32xf32>
    %cst_7 = arith.constant dense<0.000000e+00> : vector<4xf32>
    %15 = vector.multi_reduction <add>, %14, %cst_7 [0, 2] : vector<2x4x32xf32> to vector<4xf32>
    %16 = vector.shape_cast %15 : vector<4xf32> to vector<1x4x1xf32>
    %cst_8 = arith.constant 6.400000e+01 : f32
    %17 = vector.broadcast %cst_8 : f32 to vector<1x4x1xf32>
    %18 = arith.divf %16, %17 : vector<1x4x1xf32>
    %cst_9 = arith.constant 9.99999974E-6 : f32
    %19 = vector.broadcast %cst_9 : f32 to vector<1x4x1xf32>
    %20 = arith.addf %18, %19 : vector<1x4x1xf32>
    %21 = math.rsqrt %20 : vector<1x4x1xf32>
    %22 = vector.broadcast %21 : vector<1x4x1xf32> to vector<2x4x32xf32>
    %23 = arith.mulf %13, %22 : vector<2x4x32xf32>
    %c0_10 = arith.constant 0 : index
    %c0_11 = arith.constant 0 : index
    %c0_12 = arith.constant 0 : index
    %24 = vector.load %arg3[%c0_10, %c0_11, %c0_12] : memref<1x4x1xf32, #tpu.memory_space<vmem>>, vector<1x4x1xf32>
    %25 = vector.broadcast %24 : vector<1x4x1xf32> to vector<2x4x32xf32>
    %26 = arith.mulf %23, %25 : vector<2x4x32xf32>
    %c0_13 = arith.constant 0 : index
    %c0_14 = arith.constant 0 : index
    %c0_15 = arith.constant 0 : index
    %27 = vector.load %arg4[%c0_13, %c0_14, %c0_15] : memref<1x4x1xf32, #tpu.memory_space<vmem>>, vector<1x4x1xf32>
    %28 = vector.broadcast %27 : vector<1x4x1xf32> to vector<2x4x32xf32>
    %29 = arith.addf %26, %28 : vector<2x4x32xf32>
    %cst_16 = arith.constant 0.000000e+00 : f32
    %30 = vector.broadcast %cst_16 : f32 to vector<2x4x32xf32>
    %31 = arith.maximumf %29, %30 : vector<2x4x32xf32>
    %32 = vector.shape_cast %31 : vector<2x4x32xf32> to vector<8x32xf32>
    %33 = arith.truncf %32 : vector<8x32xf32> to vector<8x32xbf16>
    %c0_17 = arith.constant 0 : index
    %c0_18 = arith.constant 0 : index
    %34 = vector.load %arg5[%c0_17, %c0_18] : memref<32x32xbf16, #tpu.memory_space<vmem>>, vector<32x32xbf16>
    %cst_19 = arith.constant dense<0.000000e+00> : vector<8x32xf32>
    %35 = tpu.matmul %33, %34, %cst_19 {dimension_numbers = #tpu.dot_dimension_numbers<[1], [0], [0], [1], [0, 0, 1, 1], [], []>} : vector<8x32xbf16>, vector<32x32xbf16>, vector<8x32xf32> -> vector<8x32xf32>
    %c0_20 = arith.constant 0 : index
    %c0_21 = arith.constant 0 : index
    %36 = vector.load %arg6[%c0_20, %c0_21] : memref<1x32xf32, #tpu.memory_space<vmem>>, vector<1x32xf32>
    %37 = vector.broadcast %36 : vector<1x32xf32> to vector<8x32xf32>
    %38 = arith.addf %35, %37 : vector<8x32xf32>
    %39 = vector.shape_cast %38 : vector<8x32xf32> to vector<2x4x32xf32>
    %cst_22 = arith.constant dense<0.000000e+00> : vector<4xf32>
    %40 = vector.multi_reduction <add>, %39, %cst_22 [0, 2] : vector<2x4x32xf32> to vector<4xf32>
    %41 = vector.shape_cast %40 : vector<4xf32> to vector<1x4x1xf32>
    %cst_23 = arith.constant 6.400000e+01 : f32
    %42 = vector.broadcast %cst_23 : f32 to vector<1x4x1xf32>
    %43 = arith.divf %41, %42 : vector<1x4x1xf32>
    %44 = vector.broadcast %43 : vector<1x4x1xf32> to vector<2x4x32xf32>
    %45 = arith.subf %39, %44 : vector<2x4x32xf32>
    %46 = arith.mulf %45, %45 : vector<2x4x32xf32>
    %cst_24 = arith.constant dense<0.000000e+00> : vector<4xf32>
    %47 = vector.multi_reduction <add>, %46, %cst_24 [0, 2] : vector<2x4x32xf32> to vector<4xf32>
    %48 = vector.shape_cast %47 : vector<4xf32> to vector<1x4x1xf32>
    %cst_25 = arith.constant 6.400000e+01 : f32
    %49 = vector.broadcast %cst_25 : f32 to vector<1x4x1xf32>
    %50 = arith.divf %48, %49 : vector<1x4x1xf32>
    %cst_26 = arith.constant 9.99999974E-6 : f32
    %51 = vector.broadcast %cst_26 : f32 to vector<1x4x1xf32>
    %52 = arith.addf %50, %51 : vector<1x4x1xf32>
    %53 = math.rsqrt %52 : vector<1x4x1xf32>
    %54 = vector.broadcast %53 : vector<1x4x1xf32> to vector<2x4x32xf32>
    %55 = arith.mulf %45, %54 : vector<2x4x32xf32>
    %c0_27 = arith.constant 0 : index
    %c0_28 = arith.constant 0 : index
    %c0_29 = arith.constant 0 : index
    %56 = vector.load %arg7[%c0_27, %c0_28, %c0_29] : memref<1x4x1xf32, #tpu.memory_space<vmem>>, vector<1x4x1xf32>
    %57 = vector.broadcast %56 : vector<1x4x1xf32> to vector<2x4x32xf32>
    %58 = arith.mulf %55, %57 : vector<2x4x32xf32>
    %c0_30 = arith.constant 0 : index
    %c0_31 = arith.constant 0 : index
    %c0_32 = arith.constant 0 : index
    %59 = vector.load %arg8[%c0_30, %c0_31, %c0_32] : memref<1x4x1xf32, #tpu.memory_space<vmem>>, vector<1x4x1xf32>
    %60 = vector.broadcast %59 : vector<1x4x1xf32> to vector<2x4x32xf32>
    %61 = arith.addf %58, %60 : vector<2x4x32xf32>
    %cst_33 = arith.constant 0.000000e+00 : f32
    %62 = vector.broadcast %cst_33 : f32 to vector<2x4x32xf32>
    %63 = arith.maximumf %61, %62 : vector<2x4x32xf32>
    %64 = vector.shape_cast %63 : vector<2x4x32xf32> to vector<8x32xf32>
    %65 = arith.addf %0, %64 : vector<8x32xf32>
    %c0_34 = arith.constant 0 : index
    %c0_35 = arith.constant 0 : index
    %66 = vector.load %arg9[%c0_34, %c0_35] : memref<8x32xf32, #tpu.memory_space<vmem>>, vector<8x32xf32>
    tpu.vector_store %arg9[%c0_34, %c0_35], %65 {strides = array<i32>} : memref<8x32xf32, #tpu.memory_space<vmem>>, vector<8x32xf32>,
    return
  }
}

</mosaic_0001>

<llo_original>
// kernel: tpu_custom_call.1
$region0: #{tpu_custom_call.1}
  #allocation0 [shape = 'u32[]', space=smem, size = 0x4, offset = 0x4, fixed_abs, tag = 'smem constant byte address 0x4 - core index']
  #allocation1 [shape = 'u32[144,128]{1,0:T(1,128)}', space=vmem, size = 0x12000, scoped, tag = 'internal scratch']
  %s0 = inlined_call_operand.hbm [shape: f32[8,32], index: 0, kind: input, shape index: {}]
  %s1 = inlined_call_operand.vmem [shape: bf16[32,32], index: 1, kind: input, shape index: {}]
  %s2 = inlined_call_operand.vmem [shape: f32[1,32], index: 2, kind: input, shape index: {}]
  %s3 = inlined_call_operand.vmem [shape: f32[1,4,1], index: 3, kind: input, shape index: {}]
  %s4 = inlined_call_operand.vmem [shape: f32[1,4,1], index: 4, kind: input, shape index: {}]
  %s5 = inlined_call_operand.vmem [shape: bf16[32,32], index: 5, kind: input, shape index: {}]
  %s6 = inlined_call_operand.vmem [shape: f32[1,32], index: 6, kind: input, shape index: {}]
  %s7 = inlined_call_operand.vmem [shape: f32[1,4,1], index: 7, kind: input, shape index: {}]
  %s8 = inlined_call_operand.vmem [shape: f32[1,4,1], index: 8, kind: input, shape index: {}]
  %s9 = inlined_call_operand.hbm [shape: f32[8,32], index: 9, kind: output, shape index: {}]
  %s10 = sld [smem:[#allocation0]]
  $region50: #{tpu_custom_call.1} parent=0
    _
  %s12 = ssub.s32 1, %s10
  %s13 = scalar_select 0, %s12, %s10
  $region1: #{tpu_custom_call.1} parent=0
    #allocation2 [shape = 'u8[4096]{0}', space=vmem, size = 0x1000, scoped, tag = 'input window, operand 0, single buffered']
    #allocation3 [shape = 's32[1]{0}', space=sflag, size = 0x4, scoped, tag = 'scoped memory for tpu_custom_call.1']
    #allocation4 [shape = 's32[1]{0}', space=sflag, size = 0x4, scoped, tag = 'scoped memory for tpu_custom_call.1']
    #allocation5 [shape = 'u8[4096]{0}', space=vmem, size = 0x1000, scoped, tag = 'output window, operand 0, single buffered']
    %14 = vsyncpa [#allocation3], 0
    %15 = vsyncpa [#allocation4], 0
    // Predicated region
    $region2: #{tpu_custom_call.1} parent=1 // pred_check
      _
    $region3: #{tpu_custom_call.1} parent=1 // pred_check_branch
      %17 = sbr.rel (0) target = $region5
    $region4: #{tpu_custom_call.1} parent=1 // pred_region
      %s19 = ssub.s32 128, 128
      %20 = vsyncadd [#allocation3], %s19
      %s22 = sshll.u32 [#allocation2], 4
      %s23 = int_to_ptr.vmem [resolvable:$true] %s22
      %25 = dma.hbm_to_vmem [thread:$0]  %s0, 128, %s23, [#allocation3]
    $region5: #{tpu_custom_call.1} parent=1 // pred_fallthru
      _
    // Predicated region
    $region6: #{tpu_custom_call.1} parent=1 // pred_check
      _
    $region7: #{tpu_custom_call.1} parent=1 // pred_check_branch
      %27 = sbr.rel (0) target = $region9
    $region8: #{tpu_custom_call.1} parent=1 // pred_region
      _
    $region9: #{tpu_custom_call.1} parent=1 // pred_fallthru
      _
    // Predicated region
    $region10: #{tpu_custom_call.1} parent=1 // pred_check
      _
    $region11: #{tpu_custom_call.1} parent=1 // pred_check_branch
      %29 = sbr.rel (0) target = $region13
    $region12: #{tpu_custom_call.1} parent=1 // pred_region
      _
    $region13: #{tpu_custom_call.1} parent=1 // pred_fallthru
      _
    // Predicated region
    $region14: #{tpu_custom_call.1} parent=1 // pred_check
      _
    $region15: #{tpu_custom_call.1} parent=1 // pred_check_branch
      %31 = sbr.rel (0) target = $region17
    $region16: #{tpu_custom_call.1} parent=1 // pred_region
      _
    $region17: #{tpu_custom_call.1} parent=1 // pred_fallthru
      _
    // Predicated region
    $region18: #{tpu_custom_call.1} parent=1 // pred_check
      _
    $region19: #{tpu_custom_call.1} parent=1 // pred_check_branch
      %33 = sbr.rel (0) target = $region21
    $region20: #{tpu_custom_call.1} parent=1 // pred_region
      _
    $region21: #{tpu_custom_call.1} parent=1 // pred_fallthru
      _
    // Predicated region
    $region22: #{tpu_custom_call.1} parent=1 // pred_check
      _
    $region23: #{tpu_custom_call.1} parent=1 // pred_check_branch
      %35 = sbr.rel (0) target = $region25
    $region24: #{tpu_custom_call.1} parent=1 // pred_region
      _
    $region25: #{tpu_custom_call.1} parent=1 // pred_fallthru
      _
    // Predicated region
    $region26: #{tpu_custom_call.1} parent=1 // pred_check
      _
    $region27: #{tpu_custom_call.1} parent=1 // pred_check_branch
      %37 = sbr.rel (0) target = $region29
    $region28: #{tpu_custom_call.1} parent=1 // pred_region
      _
    $region29: #{tpu_custom_call.1} parent=1 // pred_fallthru
      _
    // Predicated region
    $region30: #{tpu_custom_call.1} parent=1 // pred_check
      _
    $region31: #{tpu_custom_call.1} parent=1 // pred_check_branch
      %39 = sbr.rel (0) target = $region33
    $region32: #{tpu_custom_call.1} parent=1 // pred_region
      _
    $region33: #{tpu_custom_call.1} parent=1 // pred_fallthru
      _
    // Predicated region
    $region34: #{tpu_custom_call.1} parent=1 // pred_check
      _
    $region35: #{tpu_custom_call.1} parent=1 // pred_check_branch
      %41 = sbr.rel (0) target = $region37
    $region36: #{tpu_custom_call.1} parent=1 // pred_region
      _
    $region37: #{tpu_custom_call.1} parent=1 // pred_fallthru
      _
    // Predicated region
    $region38: #{tpu_custom_call.1} parent=1 // pred_check
      _
    $region39: #{tpu_custom_call.1} parent=1 // pred_check_branch
      %43 = sbr.rel (0) target = $region41
    $region40: #{tpu_custom_call.1} parent=1 // pred_region
      %44 = dma.done [#allocation3], 128
    $region41: #{tpu_custom_call.1} parent=1 // pred_fallthru
      _
    %v46 = vld [vmem:[#allocation2] sm:$0xff]
    %v47 = vpack.c.bf16 %v46, %v46
    %v48 = vld [vmem:[%s1] sm:$0xf]
    %v49 = vld [vmem:[%s1 + $0x4] sm:$0xf]
    %v50 = vld [vmem:[%s1 + $0x8] sm:$0xf]
    %v51 = vld [vmem:[%s1 + $0xc] sm:$0xf]
    %v52 = vld [vmem:[%s2] sm:$0x1]
    %v54 = vlaneseq
    %v55 = vshrl.u32 %v54, 7
    %v56 = vsub.s32 0, %v55
    %v57 = vrot.slane %v52, %v56
    %v63 = vunpack.c.l.b16 %v48
    %v64 = vunpack.c.l.b16 %v49
    %v65 = vunpack.c.l.b16 %v50
    %v66 = vunpack.c.l.b16 %v51
    %v67 = vpack.c.b16 %v64, %v63
    %v68 = vpack.c.b16 %v66, %v65
    %vm71 = vcmask 261120
    %v73 = vsel %vm71, %v47, 0
    %75 = vmatprep.subr.bf16.mxu0 0
    %76 = vmatpush1.bf16.msra.mxu0 %v67
    %77 = vmatprep.subr.bf16.mxu0 0
    %78 = vmatpush1.bf16.msra.mxu0 %v68
    %79 = vmatprep.subr.bf16.mxu0 0
    %80 = vmatpush1.bf16.msra.mxu0 0
    %81 = vmatprep.subr.bf16.mxu0 0
    %82 = vmatpush1.bf16.msra.mxu0 0
    %83 = vmatprep.subr.bf16.mxu0 0
    %84 = vmatpush1.bf16.msra.mxu0 0
    %85 = vmatprep.subr.bf16.mxu0 0
    %86 = vmatpush1.bf16.msra.mxu0 0
    %87 = vmatprep.subr.bf16.mxu0 0
    %88 = vmatpush1.bf16.msra.mxu0 0
    %89 = vmatprep.subr.bf16.mxu0 0
    %90 = vmatpush1.bf16.msra.mxu0 0
    %91 = vmatprep.subr.bf16.mxu0 0
    %92 = vmatpush1.bf16.msra.mxu0 0
    %93 = vmatprep.subr.bf16.mxu0 0
    %94 = vmatpush1.bf16.msra.mxu0 0
    %95 = vmatprep.subr.bf16.mxu0 0
    %96 = vmatpush1.bf16.msra.mxu0 0
    %97 = vmatprep.subr.bf16.mxu0 0
    %98 = vmatpush1.bf16.msra.mxu0 0
    %99 = vmatprep.subr.bf16.mxu0 0
    %100 = vmatpush1.bf16.msra.mxu0 0
    %101 = vmatprep.subr.bf16.mxu0 0
    %102 = vmatpush1.bf16.msra.mxu0 0
    %103 = vmatprep.subr.bf16.mxu0 0
    %104 = vmatpush1.bf16.msra.mxu0 0
    %105 = vmatprep.subr.bf16.mxu0 0
    %106 = vmatpush1.bf16.msra.mxu0 0
    %107 = vmatprep.mubr.bf16.mxu0 0
    %108 = vmatmul.mubr.bf16.gmra.mrb[0].mxu0 %v73
    %v109 = vpop.f32.mrb[0].mxu0
    %v110 = vadd.f32 %v57, %v109
    %v111 = vpop.f32.mrb[0].mxu0
    %v112 = vpop.f32.mrb[0].mxu0
    %v113 = vpop.f32.mrb[0].mxu0
    %114 = vdwg.mxu0
    %v116 = vcombine.high %v110, %v110
    %vm118 = vcmask 257024
    %v119 = vsel %vm118, %v110, 0.0
    %v120 = vsel %vm118, %v116, 0.0
    %v121 = vadd.f32 %v119, %v120
    %122 = vadd.xlane.f32.xlu0 %v121
    %v123 = vpop.xlane.xlu0 %122
    %v124 = vrcp.pop 64.0
    %v125 = vmul.f32 %v123, %v124
    %v126 = vsub.f32 %v110, %v125
    %v127 = vsub.f32 %v116, %v125
    %v128 = vmul.f32 %v126, %v126
    %v129 = vmul.f32 %v127, %v127
    %v130 = vsel %vm118, %v128, 0.0
    %v131 = vsel %vm118, %v129, 0.0
    %v132 = vadd.f32 %v130, %v131
    %133 = vadd.xlane.f32.xlu0 %v132
    %v134 = vpop.xlane.xlu0 %133
    %v135 = vmul.f32 %v134, %v124
    %v136 = vadd.f32 %v135, 1e-05
    %v137 = vrsqrt.pop %v136
    %v138 = vmul.f32 %v126, %v137
    %v139 = vmul.f32 %v127, %v137
    %v140 = vld [vmem:[%s3] sm:$0xf]
    %142 = vset.pattern.permute.xlu0 0
    %143 = vperm.xlu0 %142, %v140
    %v144 = vpop.permute.xlu0 %143
    %v146 = vmul.f32 %v138, %v144
    %v147 = vmul.f32 %v139, %v144
    %v148 = vld [vmem:[%s4] sm:$0xf]
    %150 = vset.pattern.permute.xlu0 0
    %151 = vperm.xlu0 %150, %v148
    %v152 = vpop.permute.xlu0 %151
    %v154 = vadd.f32 %v146, %v152
    %v155 = vadd.f32 %v147, %v152
    %v156 = vmax.f32 %v154, 0.0
    %v157 = vmax.f32 %v155, 0.0
    %v160 = vcombine.low %v156, %v157
    %v162 = vpack.c.bf16 %v160, %v160
    %v163 = vld [vmem:[%s5] sm:$0xf]
    %v164 = vld [vmem:[%s5 + $0x4] sm:$0xf]
    %v165 = vld [vmem:[%s5 + $0x8] sm:$0xf]
    %v166 = vld [vmem:[%s5 + $0xc] sm:$0xf]
    %v167 = vld [vmem:[%s6] sm:$0x1]
    %v169 = vlaneseq
    %v170 = vshrl.u32 %v169, 7
    %v171 = vsub.s32 0, %v170
    %v172 = vrot.slane %v167, %v171
    %v178 = vunpack.c.l.b16 %v163
    %v179 = vunpack.c.l.b16 %v164
    %v180 = vunpack.c.l.b16 %v165
    %v181 = vunpack.c.l.b16 %v166
    %v182 = vpack.c.b16 %v179, %v178
    %v183 = vpack.c.b16 %v181, %v180
    %v187 = vsel %vm71, %v162, 0
    %189 = vmatprep.subr.bf16.mxu0 0
    %190 = vmatpush1.bf16.msra.mxu0 %v182
    %191 = vmatprep.subr.bf16.mxu0 0
    %192 = vmatpush1.bf16.msra.mxu0 %v183
    %193 = vmatprep.subr.bf16.mxu0 0
    %194 = vmatpush1.bf16.msra.mxu0 0
    %195 = vmatprep.subr.bf16.mxu0 0
    %196 = vmatpush1.bf16.msra.mxu0 0
    %197 = vmatprep.subr.bf16.mxu0 0
    %198 = vmatpush1.bf16.msra.mxu0 0
    %199 = vmatprep.subr.bf16.mxu0 0
    %200 = vmatpush1.bf16.msra.mxu0 0
    %201 = vmatprep.subr.bf16.mxu0 0
    %202 = vmatpush1.bf16.msra.mxu0 0
    %203 = vmatprep.subr.bf16.mxu0 0
    %204 = vmatpush1.bf16.msra.mxu0 0
    %205 = vmatprep.subr.bf16.mxu0 0
    %206 = vmatpush1.bf16.msra.mxu0 0
    %207 = vmatprep.subr.bf16.mxu0 0
    %208 = vmatpush1.bf16.msra.mxu0 0
    %209 = vmatprep.subr.bf16.mxu0 0
    %210 = vmatpush1.bf16.msra.mxu0 0
    %211 = vmatprep.subr.bf16.mxu0 0
    %212 = vmatpush1.bf16.msra.mxu0 0
    %213 = vmatprep.subr.bf16.mxu0 0
    %214 = vmatpush1.bf16.msra.mxu0 0
    %215 = vmatprep.subr.bf16.mxu0 0
    %216 = vmatpush1.bf16.msra.mxu0 0
    %217 = vmatprep.subr.bf16.mxu0 0
    %218 = vmatpush1.bf16.msra.mxu0 0
    %219 = vmatprep.subr.bf16.mxu0 0
    %220 = vmatpush1.bf16.msra.mxu0 0
    %221 = vmatprep.mubr.bf16.mxu0 0
    %222 = vmatmul.mubr.bf16.gmra.mrb[0].mxu0 %v187
    %v223 = vpop.f32.mrb[0].mxu0
    %v224 = vadd.f32 %v172, %v223
    %v225 = vpop.f32.mrb[0].mxu0
    %v226 = vpop.f32.mrb[0].mxu0
    %v227 = vpop.f32.mrb[0].mxu0
    %228 = vdwg.mxu0
    %v230 = vcombine.high %v224, %v224
    %v232 = vsel %vm118, %v224, 0.0
    %v233 = vsel %vm118, %v230, 0.0
    %v234 = vadd.f32 %v232, %v233
    %235 = vadd.xlane.f32.xlu0 %v234
    %v236 = vpop.xlane.xlu0 %235
    %v237 = vmul.f32 %v236, %v124
    %v238 = vsub.f32 %v224, %v237
    %v239 = vsub.f32 %v230, %v237
    %v240 = vmul.f32 %v238, %v238
    %v241 = vmul.f32 %v239, %v239
    %v242 = vsel %vm118, %v240, 0.0
    %v243 = vsel %vm118, %v241, 0.0
    %v244 = vadd.f32 %v242, %v243
    %245 = vadd.xlane.f32.xlu0 %v244
    %v246 = vpop.xlane.xlu0 %245
    %v247 = vmul.f32 %v246, %v124
    %v248 = vadd.f32 %v247, 1e-05
    %v249 = vrsqrt.pop %v248
    %v250 = vmul.f32 %v238, %v249
    %v251 = vmul.f32 %v239, %v249
    %v252 = vld [vmem:[%s7] sm:$0xf]
    %254 = vset.pattern.permute.xlu0 0
    %255 = vperm.xlu0 %254, %v252
    %v256 = vpop.permute.xlu0 %255
    %v258 = vmul.f32 %v250, %v256
    %v259 = vmul.f32 %v251, %v256
    %v260 = vld [vmem:[%s8] sm:$0xf]
    %262 = vset.pattern.permute.xlu0 0
    %263 = vperm.xlu0 %262, %v260
    %v264 = vpop.permute.xlu0 %263
    %v266 = vadd.f32 %v258, %v264
    %v267 = vadd.f32 %v259, %v264
    %v268 = vmax.f32 %v266, 0.0
    %v269 = vmax.f32 %v267, 0.0
    %v272 = vcombine.low %v268, %v269
    %v274 = vadd.f32 %v46, %v272
    %275 = vst.msk [vmem:[#allocation5] sm:$0xff] %vm71, %v274
    // Predicated region
    $region42: #{tpu_custom_call.1} parent=1 // pred_check
      _
    $region43: #{tpu_custom_call.1} parent=1 // pred_check_branch
      %277 = sbr.rel (0) target = $region45
    $region44: #{tpu_custom_call.1} parent=1 // pred_region
      %s279 = ssub.s32 128, 128
      %280 = vsyncadd [#allocation4], %s279
      %s282 = sshll.u32 [#allocation5], 4
      %s283 = int_to_ptr.vmem [resolvable:$true] %s282
      %285 = dma.vmem_to_hbm [thread:$0]  %s283, 128, %s9, [#allocation4]
    $region45: #{tpu_custom_call.1} parent=1 // pred_fallthru
      _
    // Predicated region
    $region46: #{tpu_custom_call.1} parent=1 // pred_check
      _
    $region47: #{tpu_custom_call.1} parent=1 // pred_check_branch
      %287 = sbr.rel (0) target = $region49
    $region48: #{tpu_custom_call.1} parent=1 // pred_region
      %288 = dma.done [#allocation4], 128
    $region49: #{tpu_custom_call.1} parent=1 // pred_fallthru
      _
    %289 = vsyncpa [#allocation3], 1
    %290 = vsyncpa [#allocation4], 1

</llo_original>
